<compile_context>
chip_gen: v7x
topology: tpu7x:2x2x1
jax: 0.10.0
libtpu: 0.0.40
codegen_flags: <defaults>
</compile_context>

<pallas_src>
import jax
import jax.numpy as jnp
from jax.experimental import pallas as pl
from jax.experimental.pallas import tpu as pltpu

BN_EPS = 1e-5
_LANE = 128
_SUBLANE = 8

_VMEM_LIMIT = 32 * 1024 * 1024        # scoped VMEM requested from Mosaic (safe on all gens)
_TILE_VMEM_BUDGET = 12 * 1024 * 1024  # double-buffered (input + output) pixel tiles
_MAX_ROWS_TILE = 2048                 # rows per tile cap (2048*128 px, ~4 MiB/buf at C=4 f32)
_FUSED_VMEM_BUDGET = 10 * 1024 * 1024 # resident footprint cap for the single-call fast path


def _cdiv(a, b):
    return -(-a // b)


# ---------------------------------------------------------------------------
# Fused single-call kernel (small inputs): stats + BN fold + FMA, x read once.
# ---------------------------------------------------------------------------
def _make_fused_kernel(num_channels, pixel_count, eps):
    inv_p = 1.0 / float(pixel_count)

    def kernel(w_ref, g_ref, b_ref, cb_ref, x_ref, o_ref):
        # w/g/b: SMEM (C,), cb: SMEM (1,)
        # x_ref: VMEM (N, C, rows, 128) resident; o_ref: VMEM (N, rows, 128)
        acc = jnp.zeros(o_ref.shape, jnp.float32)
        bias = cb_ref[0]
        for c in range(num_channels):                       # C is tiny -> unrolled
            xc = x_ref[:, c, :, :].astype(jnp.float32)      # (N, rows, 128)
            mean = jnp.sum(xc) * inv_p                      # zero-padding safe (true P)
            var = jnp.maximum(jnp.sum(xc * xc) * inv_p - mean * mean, 0.0)
            inv_std = jax.lax.rsqrt(var + eps)
            a_c = w_ref[c] * g_ref[c] * inv_std
            bias = bias + w_ref[c] * (b_ref[c] - g_ref[c] * inv_std * mean)
            acc = acc + a_c * xc
        o_ref[...] = (acc + bias).astype(o_ref.dtype)

    return kernel


# ---------------------------------------------------------------------------
# Streaming pass 1: per-sample lane-partial sum / sum-of-squares accumulators.
# ---------------------------------------------------------------------------
def _make_stats_kernel(rows_total, rows_tile, mask_tail):
    def kernel(x_ref, stats_ref):
        # x_ref: (C, rows_tile, 128); stats_ref: (2, C, 128) resident across row tiles.
        @pl.when(pl.program_id(1) == 0)
        def _init():
            stats_ref[...] = jnp.zeros_like(stats_ref)

        x = x_ref[...].astype(jnp.float32)
        if mask_tail:
            # Last row tile overhangs `rows_total`: zero the out-of-range rows
            # (cheap VPU compare+select; exactness preserved since we divide by true P).
            valid = rows_total - pl.program_id(1) * rows_tile
            rid = jax.lax.broadcasted_iota(jnp.int32, x.shape, dimension=1)
            x = jnp.where(rid < valid, x, 0.0)

        # Sublane-direction (axis=1) reduction only: vreg-wise VPU adds plus a tiny
        # intra-vreg fold.  The 128-wide lane reduction is done ONCE in the wrapper
        # on the (N, 2, C, 128) partials, keeping this pass off the XLU.
        stats_ref[0] += jnp.sum(x, axis=1)
        stats_ref[1] += jnp.sum(x * x, axis=1)

    return kernel


# ---------------------------------------------------------------------------
# Streaming pass 2: BN-folded per-channel FMA (scalars in SMEM).
# ---------------------------------------------------------------------------
def _make_fma_kernel(num_channels):
    def kernel(coef_ref, x_ref, o_ref):
        # coef_ref: SMEM (C+1,) = [a_0 .. a_{C-1}, bias]
        # x_ref: (C, rows_tile, 128); o_ref: (rows_tile, 128) lane/sublane-dense logits
        acc = coef_ref[0] * x_ref[0].astype(jnp.float32)
        for c in range(1, num_channels):
            acc = acc + coef_ref[c] * x_ref[c].astype(jnp.float32)
        o_ref[...] = (acc + coef_ref[num_channels]).astype(o_ref.dtype)

    return kernel


def pixel_to_part_classifier(x_nchw, gamma, beta, conv_w, conv_b,
                             *, force_tiled=False, rows_tile_cap=None):
    """Forward of PixelToPartClassifier (training-mode BN + 1x1 conv).

    x_nchw: (N, C, H, W). Returns (N, 1, H, W) float32 logits.
    """
    N, C, H, W = x_nchw.shape
    HW = H * W
    P = N * HW                                      # true pixel count for BN stats
    elt = jnp.dtype(x_nchw.dtype).itemsize
    sub_mult = max(_SUBLANE, 32 // elt)             # (8,128) f32 / (16,128) bf16 / (32,128) 8-bit

    # Layout: NCHW -> (N, C, rows, 128) per-channel pixel planes (contiguous reshape).
    rows = _cdiv(HW, _LANE)
    padded_hw = rows * _LANE
    x_flat = x_nchw.reshape(N, C, HW)
    if padded_hw != HW:
        # Pad only when strictly required (HW not a multiple of 128).  Zero pixels do
        # not perturb sum/sumsq because we divide by the true P; padded logits are
        # sliced off at the end.
        x_flat = jnp.pad(x_flat, ((0, 0), (0, 0), (0, padded_hw - HW)))
    x4 = x_flat.reshape(N, C, rows, _LANE)

    w = conv_w.reshape(C).astype(jnp.float32)
    g = gamma.reshape(C).astype(jnp.float32)
    b = beta.reshape(C).astype(jnp.float32)
    cb = conv_b.reshape(1).astype(jnp.float32)

    # ---- small-input fast path: single pallas_call, x read from HBM exactly once ----
    fused_bytes = N * rows * _LANE * (C * elt + 16)   # x + out + acc + per-channel temps
    if (not force_tiled) and fused_bytes <= _FUSED_VMEM_BUDGET:
        out3 = pl.pallas_call(
            _make_fused_kernel(C, P, BN_EPS),
            out_shape=jax.ShapeDtypeStruct((N, rows, _LANE), jnp.float32),
            in_specs=[
                pl.BlockSpec(memory_space=pltpu.MemorySpace.SMEM),   # conv weight (C,)
                pl.BlockSpec(memory_space=pltpu.MemorySpace.SMEM),   # gamma (C,)
                pl.BlockSpec(memory_space=pltpu.MemorySpace.SMEM),   # beta (C,)
                pl.BlockSpec(memory_space=pltpu.MemorySpace.SMEM),   # conv bias (1,)
                pl.BlockSpec(memory_space=pltpu.MemorySpace.VMEM),   # x resident in VMEM
            ],
            out_specs=pl.BlockSpec(memory_space=pltpu.MemorySpace.VMEM),
            compiler_params=pltpu.CompilerParams(vmem_limit_bytes=_VMEM_LIMIT),
        )(w, g, b, cb, x4)
    else:
        # ---- streaming two-pass path ----
        max_tile = rows_tile_cap if rows_tile_cap is not None else _MAX_ROWS_TILE
        bytes_per_row = C * _LANE * elt + _LANE * 4   # input rows (x dtype) + output row (f32)
        max_rows = min(max_tile,
                       max(sub_mult, _TILE_VMEM_BUDGET // (2 * bytes_per_row)))
        if rows <= max_rows:
            rows_tile = rows                          # full extent (allowed even if <8)
        else:
            rows_tile = (max_rows // sub_mult) * sub_mult
        n_row_tiles = _cdiv(rows, rows_tile)
        mask_tail = (n_row_tiles > 1) and (rows % rows_tile != 0)

        # Pass 1: per-(sample, channel, lane) partial sums / sums-of-squares.
        # N axis "parallel" (per-n accumulator slices -> no race, megacore on v7x),
        # row axis "arbitrary" (resident accumulation).
        stats = pl.pallas_call(
            _make_stats_kernel(rows, rows_tile, mask_tail),
            out_shape=jax.ShapeDtypeStruct((N, 2, C, _LANE), jnp.float32),
            grid=(N, n_row_tiles),
            in_specs=[pl.BlockSpec((None, C, rows_tile, _LANE),
                                   lambda n, r: (n, 0, r, 0))],
            out_specs=pl.BlockSpec((None, 2, C, _LANE),
                                   lambda n, r: (n, 0, 0, 0)),
            compiler_params=pltpu.CompilerParams(
                dimension_semantics=("parallel", "arbitrary"),
                vmem_limit_bytes=_VMEM_LIMIT),
        )(x4)

        # Final lane reduction + BN->conv fold: tiny O(N*C*128) / O(C) wrapper work.
        sums = jnp.sum(stats[:, 0], axis=(0, 2))               # (C,)
        sumsqs = jnp.sum(stats[:, 1], axis=(0, 2))             # (C,)
        mean = sums / P
        var = jnp.maximum(sumsqs / P - mean * mean, 0.0)       # biased variance
        inv_std = jax.lax.rsqrt(var + BN_EPS)
        a = w * g * inv_std                                    # (C,)
        bias = cb[0] + jnp.sum(w * (b - g * inv_std * mean))
        coeffs = jnp.concatenate([a, bias[None]]).astype(jnp.float32)   # (C+1,)

        # Pass 2: per-pixel BN-folded channel FMA; both axes parallel (megacore).
        out3 = pl.pallas_call(
            _make_fma_kernel(C),
            out_shape=jax.ShapeDtypeStruct((N, rows, _LANE), jnp.float32),
            grid=(N, n_row_tiles),
            in_specs=[
                pl.BlockSpec(memory_space=pltpu.MemorySpace.SMEM),
                pl.BlockSpec((None, C, rows_tile, _LANE),
                             lambda n, r: (n, 0, r, 0)),
            ],
            out_specs=pl.BlockSpec((None, rows_tile, _LANE),
                                   lambda n, r: (n, r, 0)),
            compiler_params=pltpu.CompilerParams(
                dimension_semantics=("parallel", "parallel"),
                vmem_limit_bytes=_VMEM_LIMIT),
        )(coeffs, x4)

    out = out3.reshape(N, padded_hw)
    if padded_hw != HW:
        out = out[:, :HW]          # only when HW % 128 != 0
    return out.reshape(N, 1, H, W)


def reference(x_nchw, gamma, beta, conv_w, conv_b):
    """Pure-JAX reference of the PyTorch forward (training-mode BN)."""
    mean = jnp.mean(x_nchw, axis=(0, 2, 3), keepdims=True)
    var = jnp.mean((x_nchw - mean) ** 2, axis=(0, 2, 3), keepdims=True)  # biased
    x_hat = (x_nchw - mean) / jnp.sqrt(var + BN_EPS)
    x_bn = x_hat * gamma[None, :, None, None] + beta[None, :, None, None]
    out = jnp.einsum("nchw,c->nhw", x_bn, conv_w.reshape(-1)) + conv_b.reshape(())
    return out[:, None, :, :]


if __name__ == "__main__":
    key = jax.random.PRNGKey(0)
    N, C, H, W = 2, 4, 16, 16  # dim_reduce_output = C = 4

    kx, kw, kx2 = jax.random.split(key, 3)
    x = jax.random.normal(kx, (N, C, H, W), dtype=jnp.float32)

    # Deterministic parameter init mirroring _init_params():
    gamma = jnp.ones((C,), jnp.float32)              # BN weight = 1
    beta = jnp.zeros((C,), jnp.float32)              # BN bias = 0
    conv_w = 0.001 * jax.random.normal(kw, (1, C, 1, 1), dtype=jnp.float32)
    conv_b = jnp.zeros((1,), jnp.float32)            # conv bias = 0

    ref = reference(x, gamma, beta, conv_w, conv_b)

    # 1) small-input fused fast path (single pallas_call).
    out = jax.block_until_ready(pixel_to_part_classifier(x, gamma, beta, conv_w, conv_b))
    assert out.shape == (N, 1, H, W), out.shape
    err = float(jnp.max(jnp.abs(out - ref)))
    assert jnp.allclose(out, ref, atol=1e-5, rtol=1e-5), err

    # 2) streaming two-pass path (forced), single row tile.
    out_t = jax.block_until_ready(
        pixel_to_part_classifier(x, gamma, beta, conv_w, conv_b, force_tiled=True))
    err_t = float(jnp.max(jnp.abs(out_t - ref)))
    assert jnp.allclose(out_t, ref, atol=1e-5, rtol=1e-5), err_t

    # 3) streaming path with multiple row tiles and a ragged (masked) last tile.
    H2 = W2 = 48                                      # HW = 2304 -> rows = 18, tiles of 8
    x2 = jax.random.normal(kx2, (N, C, H2, W2), dtype=jnp.float32)
    ref2 = reference(x2, gamma, beta, conv_w, conv_b)
    out2 = jax.block_until_ready(
        pixel_to_part_classifier(x2, gamma, beta, conv_w, conv_b,
                                 force_tiled=True, rows_tile_cap=8))
    assert out2.shape == (N, 1, H2, W2), out2.shape
    err2 = float(jnp.max(jnp.abs(out2 - ref2)))
    assert jnp.allclose(out2, ref2, atol=1e-5, rtol=1e-5), err2

    print("KERNEL_OK")
</pallas_src>

<mosaic_0001>
module attributes {stable_mosaic.version = 11 : i64} {
  func.func @kernel(%arg0: memref<4xf32, #tpu.memory_space<smem>>, %arg1: memref<4xf32, #tpu.memory_space<smem>>, %arg2: memref<4xf32, #tpu.memory_space<smem>>, %arg3: memref<1xf32, #tpu.memory_space<smem>>, %arg4: memref<2x4x2x128xf32, #tpu.memory_space<vmem>>, %arg5: memref<2x2x128xf32, #tpu.memory_space<vmem>>) attributes {dimension_semantics = [], scalar_prefetch = 0 : i64, scratch_operands = 0 : i64, tpu.core_type = #tpu.core_type<tc>} {
    %cst = arith.constant 0.000000e+00 : f32
    %0 = vector.broadcast %cst : f32 to vector<2x2x128xf32>
    %c0 = arith.constant 0 : index
    %1 = memref.load %arg3[%c0] : memref<1xf32, #tpu.memory_space<smem>>
    %c0_0 = arith.constant 0 : index
    %c0_1 = arith.constant 0 : index
    %c0_2 = arith.constant 0 : index
    %c0_3 = arith.constant 0 : index
    %2 = vector.load %arg4[%c0_0, %c0_1, %c0_2, %c0_3] : memref<2x4x2x128xf32, #tpu.memory_space<vmem>>, vector<2x1x2x128xf32>
    %3 = vector.shape_cast %2 : vector<2x1x2x128xf32> to vector<2x2x128xf32>
    %4 = vector.shape_cast %3 : vector<2x2x128xf32> to vector<1x2x2x128xf32>
    %cst_4 = arith.constant dense<0.000000e+00> : vector<1xf32>
    %5 = vector.multi_reduction <add>, %4, %cst_4 [1, 2, 3] : vector<1x2x2x128xf32> to vector<1xf32>
    %6 = vector.shape_cast %5 : vector<1xf32> to vector<1x1x1x1xf32>
    %7 = vector.extract %6[0, 0, 0, 0] : f32 from vector<1x1x1x1xf32>
    %cst_5 = arith.constant 0.001953125 : f32
    %8 = arith.mulf %7, %cst_5 : f32
    %9 = arith.mulf %3, %3 : vector<2x2x128xf32>
    %10 = vector.shape_cast %9 : vector<2x2x128xf32> to vector<1x2x2x128xf32>
    %cst_6 = arith.constant dense<0.000000e+00> : vector<1xf32>
    %11 = vector.multi_reduction <add>, %10, %cst_6 [1, 2, 3] : vector<1x2x2x128xf32> to vector<1xf32>
    %12 = vector.shape_cast %11 : vector<1xf32> to vector<1x1x1x1xf32>
    %13 = vector.extract %12[0, 0, 0, 0] : f32 from vector<1x1x1x1xf32>
    %cst_7 = arith.constant 0.001953125 : f32
    %14 = arith.mulf %13, %cst_7 : f32
    %15 = arith.mulf %8, %8 : f32
    %16 = arith.subf %14, %15 : f32
    %cst_8 = arith.constant 0.000000e+00 : f32
    %17 = arith.maximumf %16, %cst_8 : f32
    %cst_9 = arith.constant 9.99999974E-6 : f32
    %18 = arith.addf %17, %cst_9 : f32
    %19 = math.rsqrt %18 : f32
    %c0_10 = arith.constant 0 : index
    %20 = memref.load %arg0[%c0_10] : memref<4xf32, #tpu.memory_space<smem>>
    %c0_11 = arith.constant 0 : index
    %21 = memref.load %arg1[%c0_11] : memref<4xf32, #tpu.memory_space<smem>>
    %22 = arith.mulf %20, %21 : f32
    %23 = arith.mulf %22, %19 : f32
    %c0_12 = arith.constant 0 : index
    %24 = memref.load %arg0[%c0_12] : memref<4xf32, #tpu.memory_space<smem>>
    %c0_13 = arith.constant 0 : index
    %25 = memref.load %arg2[%c0_13] : memref<4xf32, #tpu.memory_space<smem>>
    %c0_14 = arith.constant 0 : index
    %26 = memref.load %arg1[%c0_14] : memref<4xf32, #tpu.memory_space<smem>>
    %27 = arith.mulf %26, %19 : f32
    %28 = arith.mulf %27, %8 : f32
    %29 = arith.subf %25, %28 : f32
    %30 = arith.mulf %24, %29 : f32
    %31 = arith.addf %1, %30 : f32
    %32 = vector.broadcast %23 : f32 to vector<2x2x128xf32>
    %33 = arith.mulf %32, %3 : vector<2x2x128xf32>
    %34 = arith.addf %0, %33 : vector<2x2x128xf32>
    %c0_15 = arith.constant 0 : index
    %c1 = arith.constant 1 : index
    %c0_16 = arith.constant 0 : index
    %c0_17 = arith.constant 0 : index
    %35 = vector.load %arg4[%c0_15, %c1, %c0_16, %c0_17] : memref<2x4x2x128xf32, #tpu.memory_space<vmem>>, vector<2x1x2x128xf32>
    %36 = vector.shape_cast %35 : vector<2x1x2x128xf32> to vector<2x2x128xf32>
    %37 = vector.shape_cast %36 : vector<2x2x128xf32> to vector<1x2x2x128xf32>
    %cst_18 = arith.constant dense<0.000000e+00> : vector<1xf32>
    %38 = vector.multi_reduction <add>, %37, %cst_18 [1, 2, 3] : vector<1x2x2x128xf32> to vector<1xf32>
    %39 = vector.shape_cast %38 : vector<1xf32> to vector<1x1x1x1xf32>
    %40 = vector.extract %39[0, 0, 0, 0] : f32 from vector<1x1x1x1xf32>
    %cst_19 = arith.constant 0.001953125 : f32
    %41 = arith.mulf %40, %cst_19 : f32
    %42 = arith.mulf %36, %36 : vector<2x2x128xf32>
    %43 = vector.shape_cast %42 : vector<2x2x128xf32> to vector<1x2x2x128xf32>
    %cst_20 = arith.constant dense<0.000000e+00> : vector<1xf32>
    %44 = vector.multi_reduction <add>, %43, %cst_20 [1, 2, 3] : vector<1x2x2x128xf32> to vector<1xf32>
    %45 = vector.shape_cast %44 : vector<1xf32> to vector<1x1x1x1xf32>
    %46 = vector.extract %45[0, 0, 0, 0] : f32 from vector<1x1x1x1xf32>
    %cst_21 = arith.constant 0.001953125 : f32
    %47 = arith.mulf %46, %cst_21 : f32
    %48 = arith.mulf %41, %41 : f32
    %49 = arith.subf %47, %48 : f32
    %cst_22 = arith.constant 0.000000e+00 : f32
    %50 = arith.maximumf %49, %cst_22 : f32
    %cst_23 = arith.constant 9.99999974E-6 : f32
    %51 = arith.addf %50, %cst_23 : f32
    %52 = math.rsqrt %51 : f32
    %c1_24 = arith.constant 1 : index
    %53 = memref.load %arg0[%c1_24] : memref<4xf32, #tpu.memory_space<smem>>
    %c1_25 = arith.constant 1 : index
    %54 = memref.load %arg1[%c1_25] : memref<4xf32, #tpu.memory_space<smem>>
    %55 = arith.mulf %53, %54 : f32
    %56 = arith.mulf %55, %52 : f32
    %c1_26 = arith.constant 1 : index
    %57 = memref.load %arg0[%c1_26] : memref<4xf32, #tpu.memory_space<smem>>
    %c1_27 = arith.constant 1 : index
    %58 = memref.load %arg2[%c1_27] : memref<4xf32, #tpu.memory_space<smem>>
    %c1_28 = arith.constant 1 : index
    %59 = memref.load %arg1[%c1_28] : memref<4xf32, #tpu.memory_space<smem>>
    %60 = arith.mulf %59, %52 : f32
    %61 = arith.mulf %60, %41 : f32
    %62 = arith.subf %58, %61 : f32
    %63 = arith.mulf %57, %62 : f32
    %64 = arith.addf %31, %63 : f32
    %65 = vector.broadcast %56 : f32 to vector<2x2x128xf32>
    %66 = arith.mulf %65, %36 : vector<2x2x128xf32>
    %67 = arith.addf %34, %66 : vector<2x2x128xf32>
    %c0_29 = arith.constant 0 : index
    %c2 = arith.constant 2 : index
    %c0_30 = arith.constant 0 : index
    %c0_31 = arith.constant 0 : index
    %68 = vector.load %arg4[%c0_29, %c2, %c0_30, %c0_31] : memref<2x4x2x128xf32, #tpu.memory_space<vmem>>, vector<2x1x2x128xf32>
    %69 = vector.shape_cast %68 : vector<2x1x2x128xf32> to vector<2x2x128xf32>
    %70 = vector.shape_cast %69 : vector<2x2x128xf32> to vector<1x2x2x128xf32>
    %cst_32 = arith.constant dense<0.000000e+00> : vector<1xf32>
    %71 = vector.multi_reduction <add>, %70, %cst_32 [1, 2, 3] : vector<1x2x2x128xf32> to vector<1xf32>
    %72 = vector.shape_cast %71 : vector<1xf32> to vector<1x1x1x1xf32>
    %73 = vector.extract %72[0, 0, 0, 0] : f32 from vector<1x1x1x1xf32>
    %cst_33 = arith.constant 0.001953125 : f32
    %74 = arith.mulf %73, %cst_33 : f32
    %75 = arith.mulf %69, %69 : vector<2x2x128xf32>
    %76 = vector.shape_cast %75 : vector<2x2x128xf32> to vector<1x2x2x128xf32>
    %cst_34 = arith.constant dense<0.000000e+00> : vector<1xf32>
    %77 = vector.multi_reduction <add>, %76, %cst_34 [1, 2, 3] : vector<1x2x2x128xf32> to vector<1xf32>
    %78 = vector.shape_cast %77 : vector<1xf32> to vector<1x1x1x1xf32>
    %79 = vector.extract %78[0, 0, 0, 0] : f32 from vector<1x1x1x1xf32>
    %cst_35 = arith.constant 0.001953125 : f32
    %80 = arith.mulf %79, %cst_35 : f32
    %81 = arith.mulf %74, %74 : f32
    %82 = arith.subf %80, %81 : f32
    %cst_36 = arith.constant 0.000000e+00 : f32
    %83 = arith.maximumf %82, %cst_36 : f32
    %cst_37 = arith.constant 9.99999974E-6 : f32
    %84 = arith.addf %83, %cst_37 : f32
    %85 = math.rsqrt %84 : f32
    %c2_38 = arith.constant 2 : index
    %86 = memref.load %arg0[%c2_38] : memref<4xf32, #tpu.memory_space<smem>>
    %c2_39 = arith.constant 2 : index
    %87 = memref.load %arg1[%c2_39] : memref<4xf32, #tpu.memory_space<smem>>
    %88 = arith.mulf %86, %87 : f32
    %89 = arith.mulf %88, %85 : f32
    %c2_40 = arith.constant 2 : index
    %90 = memref.load %arg0[%c2_40] : memref<4xf32, #tpu.memory_space<smem>>
    %c2_41 = arith.constant 2 : index
    %91 = memref.load %arg2[%c2_41] : memref<4xf32, #tpu.memory_space<smem>>
    %c2_42 = arith.constant 2 : index
    %92 = memref.load %arg1[%c2_42] : memref<4xf32, #tpu.memory_space<smem>>
    %93 = arith.mulf %92, %85 : f32
    %94 = arith.mulf %93, %74 : f32
    %95 = arith.subf %91, %94 : f32
    %96 = arith.mulf %90, %95 : f32
    %97 = arith.addf %64, %96 : f32
    %98 = vector.broadcast %89 : f32 to vector<2x2x128xf32>
    %99 = arith.mulf %98, %69 : vector<2x2x128xf32>
    %100 = arith.addf %67, %99 : vector<2x2x128xf32>
    %c0_43 = arith.constant 0 : index
    %c3 = arith.constant 3 : index
    %c0_44 = arith.constant 0 : index
    %c0_45 = arith.constant 0 : index
    %101 = vector.load %arg4[%c0_43, %c3, %c0_44, %c0_45] : memref<2x4x2x128xf32, #tpu.memory_space<vmem>>, vector<2x1x2x128xf32>
    %102 = vector.shape_cast %101 : vector<2x1x2x128xf32> to vector<2x2x128xf32>
    %103 = vector.shape_cast %102 : vector<2x2x128xf32> to vector<1x2x2x128xf32>
    %cst_46 = arith.constant dense<0.000000e+00> : vector<1xf32>
    %104 = vector.multi_reduction <add>, %103, %cst_46 [1, 2, 3] : vector<1x2x2x128xf32> to vector<1xf32>
    %105 = vector.shape_cast %104 : vector<1xf32> to vector<1x1x1x1xf32>
    %106 = vector.extract %105[0, 0, 0, 0] : f32 from vector<1x1x1x1xf32>
    %cst_47 = arith.constant 0.001953125 : f32
    %107 = arith.mulf %106, %cst_47 : f32
    %108 = arith.mulf %102, %102 : vector<2x2x128xf32>
    %109 = vector.shape_cast %108 : vector<2x2x128xf32> to vector<1x2x2x128xf32>
    %cst_48 = arith.constant dense<0.000000e+00> : vector<1xf32>
    %110 = vector.multi_reduction <add>, %109, %cst_48 [1, 2, 3] : vector<1x2x2x128xf32> to vector<1xf32>
    %111 = vector.shape_cast %110 : vector<1xf32> to vector<1x1x1x1xf32>
    %112 = vector.extract %111[0, 0, 0, 0] : f32 from vector<1x1x1x1xf32>
    %cst_49 = arith.constant 0.001953125 : f32
    %113 = arith.mulf %112, %cst_49 : f32
    %114 = arith.mulf %107, %107 : f32
    %115 = arith.subf %113, %114 : f32
    %cst_50 = arith.constant 0.000000e+00 : f32
    %116 = arith.maximumf %115, %cst_50 : f32
    %cst_51 = arith.constant 9.99999974E-6 : f32
    %117 = arith.addf %116, %cst_51 : f32
    %118 = math.rsqrt %117 : f32
    %c3_52 = arith.constant 3 : index
    %119 = memref.load %arg0[%c3_52] : memref<4xf32, #tpu.memory_space<smem>>
    %c3_53 = arith.constant 3 : index
    %120 = memref.load %arg1[%c3_53] : memref<4xf32, #tpu.memory_space<smem>>
    %121 = arith.mulf %119, %120 : f32
    %122 = arith.mulf %121, %118 : f32
    %c3_54 = arith.constant 3 : index
    %123 = memref.load %arg0[%c3_54] : memref<4xf32, #tpu.memory_space<smem>>
    %c3_55 = arith.constant 3 : index
    %124 = memref.load %arg2[%c3_55] : memref<4xf32, #tpu.memory_space<smem>>
    %c3_56 = arith.constant 3 : index
    %125 = memref.load %arg1[%c3_56] : memref<4xf32, #tpu.memory_space<smem>>
    %126 = arith.mulf %125, %118 : f32
    %127 = arith.mulf %126, %107 : f32
    %128 = arith.subf %124, %127 : f32
    %129 = arith.mulf %123, %128 : f32
    %130 = arith.addf %97, %129 : f32
    %131 = vector.broadcast %122 : f32 to vector<2x2x128xf32>
    %132 = arith.mulf %131, %102 : vector<2x2x128xf32>
    %133 = arith.addf %100, %132 : vector<2x2x128xf32>
    %134 = vector.broadcast %130 : f32 to vector<2x2x128xf32>
    %135 = arith.addf %133, %134 : vector<2x2x128xf32>
    %c0_57 = arith.constant 0 : index
    %c0_58 = arith.constant 0 : index
    %c0_59 = arith.constant 0 : index
    %136 = vector.load %arg5[%c0_57, %c0_58, %c0_59] : memref<2x2x128xf32, #tpu.memory_space<vmem>>, vector<2x2x128xf32>
    tpu.vector_store %arg5[%c0_57, %c0_58, %c0_59], %135 {strides = array<i32>} : memref<2x2x128xf32, #tpu.memory_space<vmem>>, vector<2x2x128xf32>,
    return
  }
}

</mosaic_0001>

<llo_original>
// kernel: tpu_custom_call.1
$region0: #{tpu_custom_call.1}
  #allocation0 [shape = 'u32[]', space=smem, size = 0x4, offset = 0x4, fixed_abs, tag = 'smem constant byte address 0x4 - core index']
  #allocation1 [shape = 'u32[144,128]{1,0:T(1,128)}', space=vmem, size = 0x12000, scoped, tag = 'internal scratch']
  #allocation2 [shape = 'f32[1]{0:T(128)S(6)}', space=smem, size = 0x200, scoped, tag = 'scoped memory for tpu_custom_call.1']
  %s0 = inlined_call_operand.vmem [shape: f32[4], index: 0, kind: input, shape index: {}]
  %s1 = inlined_call_operand.vmem [shape: f32[4], index: 1, kind: input, shape index: {}]
  %s2 = inlined_call_operand.vmem [shape: f32[4], index: 2, kind: input, shape index: {}]
  %s3 = inlined_call_operand.<no memory space> [shape: f32[1], index: 3, kind: input, shape index: {}]
  %s4 = inlined_call_operand.hbm [shape: f32[2,4,2,128], index: 4, kind: input, shape index: {}]
  %s5 = inlined_call_operand.hbm [shape: f32[2,2,128], index: 5, kind: output, shape index: {}]
  %s6 = sld [smem:[#allocation0]]
  $region46: #{tpu_custom_call.1} parent=0
    _
  %s8 = ssub.s32 1, %s6
  %s9 = scalar_select 0, %s8, %s6
  %10 = sst [smem:[#allocation2]] %s3
  $region1: #{tpu_custom_call.1} parent=0
    #allocation3 [shape = 'u8[512]{0}', space=smem, size = 0x200, scoped, tag = 'input window, operand 0, single buffered']
    #allocation4 [shape = 's32[1]{0}', space=sflag, size = 0x4, scoped, tag = 'scoped memory for tpu_custom_call.1']
    #allocation5 [shape = 's32[1]{0}', space=sflag, size = 0x4, scoped, tag = 'scoped memory for tpu_custom_call.1']
    #allocation6 [shape = 's32[1]{0}', space=sflag, size = 0x4, scoped, tag = 'scoped memory for tpu_custom_call.1']
    #allocation7 [shape = 'u8[512]{0}', space=smem, size = 0x200, scoped, tag = 'input window, operand 1, single buffered']
    #allocation8 [shape = 's32[1]{0}', space=sflag, size = 0x4, scoped, tag = 'scoped memory for tpu_custom_call.1']
    #allocation9 [shape = 'u8[512]{0}', space=smem, size = 0x200, scoped, tag = 'input window, operand 2, single buffered']
    #allocation10 [shape = 'u8[8192]{0}', space=vmem, size = 0x2000, scoped, tag = 'input window, operand 4, single buffered']
    #allocation11 [shape = 'u8[2048]{0}', space=vmem, size = 0x800, scoped, tag = 'output window, operand 0, single buffered']
    %11 = vsyncpa [#allocation6], 0
    %12 = vsyncpa [#allocation8], 0
    %13 = vsyncpa [#allocation4], 0
    %14 = vsyncpa [#allocation5], 0
    // Predicated region
    $region2: #{tpu_custom_call.1} parent=1 // pred_check
      _
    $region3: #{tpu_custom_call.1} parent=1 // pred_check_branch
      %16 = sbr.rel (0) target = $region5
    $region4: #{tpu_custom_call.1} parent=1 // pred_region
      %s18 = ssub.s32 16, 16
      %19 = vsyncadd [#allocation6], %s18
      %s21 = sshll.u32 %s0, 4
      %s22 = int_to_ptr.vmem [resolvable:$true] %s21
      %24 = dma.vmem_to_smem %s22, 16, [#allocation3], [#allocation6]
    $region5: #{tpu_custom_call.1} parent=1 // pred_fallthru
      _
    // Predicated region
    $region6: #{tpu_custom_call.1} parent=1 // pred_check
      _
    $region7: #{tpu_custom_call.1} parent=1 // pred_check_branch
      %26 = sbr.rel (0) target = $region9
    $region8: #{tpu_custom_call.1} parent=1 // pred_region
      %s28 = ssub.s32 16, 16
      %29 = vsyncadd [#allocation8], %s28
      %s31 = sshll.u32 %s1, 4
      %s32 = int_to_ptr.vmem [resolvable:$true] %s31
      %34 = dma.vmem_to_smem %s32, 16, [#allocation7], [#allocation8]
    $region9: #{tpu_custom_call.1} parent=1 // pred_fallthru
      _
    // Predicated region
    $region10: #{tpu_custom_call.1} parent=1 // pred_check
      _
    $region11: #{tpu_custom_call.1} parent=1 // pred_check_branch
      %36 = sbr.rel (0) target = $region13
    $region12: #{tpu_custom_call.1} parent=1 // pred_region
      %s38 = ssub.s32 16, 16
      %39 = vsyncadd [#allocation8], %s38
      %s41 = sshll.u32 %s2, 4
      %s42 = int_to_ptr.vmem [resolvable:$true] %s41
      %44 = dma.vmem_to_smem %s42, 16, [#allocation9], [#allocation8]
    $region13: #{tpu_custom_call.1} parent=1 // pred_fallthru
      _
    // Predicated region
    $region14: #{tpu_custom_call.1} parent=1 // pred_check
      _
    $region15: #{tpu_custom_call.1} parent=1 // pred_check_branch
      %46 = sbr.rel (0) target = $region17
    $region16: #{tpu_custom_call.1} parent=1 // pred_region
      _
    $region17: #{tpu_custom_call.1} parent=1 // pred_fallthru
      _
    // Predicated region
    $region18: #{tpu_custom_call.1} parent=1 // pred_check
      _
    $region19: #{tpu_custom_call.1} parent=1 // pred_check_branch
      %48 = sbr.rel (0) target = $region21
    $region20: #{tpu_custom_call.1} parent=1 // pred_region
      %s50 = ssub.s32 256, 256
      %51 = vsyncadd [#allocation4], %s50
      %s52 = sshll.u32 [#allocation10], 4
      %s53 = int_to_ptr.vmem [resolvable:$true] %s52
      %58 = dma.hbm_to_vmem [thread:$0]  %s4, 256, %s53, [#allocation4], 32, 32, 2
    $region21: #{tpu_custom_call.1} parent=1 // pred_fallthru
      _
    // Predicated region
    $region22: #{tpu_custom_call.1} parent=1 // pred_check
      _
    $region23: #{tpu_custom_call.1} parent=1 // pred_check_branch
      %60 = sbr.rel (0) target = $region25
    $region24: #{tpu_custom_call.1} parent=1 // pred_region
      %61 = dma.done [#allocation6], 16
    $region25: #{tpu_custom_call.1} parent=1 // pred_fallthru
      _
    // Predicated region
    $region26: #{tpu_custom_call.1} parent=1 // pred_check
      _
    $region27: #{tpu_custom_call.1} parent=1 // pred_check_branch
      %63 = sbr.rel (0) target = $region29
    $region28: #{tpu_custom_call.1} parent=1 // pred_region
      %64 = dma.done [#allocation8], 16
    $region29: #{tpu_custom_call.1} parent=1 // pred_fallthru
      _
    // Predicated region
    $region30: #{tpu_custom_call.1} parent=1 // pred_check
      _
    $region31: #{tpu_custom_call.1} parent=1 // pred_check_branch
      %66 = sbr.rel (0) target = $region33
    $region32: #{tpu_custom_call.1} parent=1 // pred_region
      %67 = dma.done [#allocation8], 16
    $region33: #{tpu_custom_call.1} parent=1 // pred_fallthru
      _
    // Predicated region
    $region34: #{tpu_custom_call.1} parent=1 // pred_check
      _
    $region35: #{tpu_custom_call.1} parent=1 // pred_check_branch
      %69 = sbr.rel (0) target = $region37
    $region36: #{tpu_custom_call.1} parent=1 // pred_region
      %70 = dma.done [#allocation4], 256
    $region37: #{tpu_custom_call.1} parent=1 // pred_fallthru
      _
    %71 = sfence
    %s72 = sld [smem:[#allocation2]]
    %v73 = vld [vmem:[#allocation10] sm:$0x3]
    %v74 = vld [vmem:[#allocation10 + $0x8] sm:$0x3]
    %vm75 = vcmask 1041408
    %v76 = vsel %vm75, %v73, 0.0
    %v77 = vsel %vm75, %v74, 0.0
    %v78 = vadd.f32 %v76, %v77
    %79 = vadd.xlane.f32.xlu0 %v78
    %v80 = vpop.xlane.xlu0 %79
    %v81 = vrot.slane %v80, 4
    %v82 = vadd.f32 %v80, %v81
    %v83 = vrot.slane %v82, 2
    %v84 = vadd.f32 %v82, %v83
    %v85 = vrot.slane %v84, 1
    %v86 = vadd.f32 %v84, %v85
    %s87 = vtos %v86
    %s88 = smul.f32 %s87, 0.001953125
    %v89 = vmul.f32 %v73, %v73
    %v90 = vmul.f32 %v74, %v74
    %v91 = vsel %vm75, %v89, 0.0
    %v92 = vsel %vm75, %v90, 0.0
    %v93 = vadd.f32 %v91, %v92
    %94 = vadd.xlane.f32.xlu0 %v93
    %v95 = vpop.xlane.xlu0 %94
    %v96 = vrot.slane %v95, 4
    %v97 = vadd.f32 %v95, %v96
    %v98 = vrot.slane %v97, 2
    %v99 = vadd.f32 %v97, %v98
    %v100 = vrot.slane %v99, 1
    %v101 = vadd.f32 %v99, %v100
    %s102 = vtos %v101
    %s103 = smul.f32 %s102, 0.001953125
    %s104 = smul.f32 %s88, %s88
    %s105 = ssub.f32 %s103, %s104
    %s106 = smax.f32 %s105, 0.0
    %s107 = sadd.f32 %s106, 1e-05
    %v108 = vstv %s107
    %v109 = vrsqrt.pop %v108
    %s110 = vtos %v109
    %s111 = sld [smem:[#allocation3]]
    %s112 = sld [smem:[#allocation7]]
    %s113 = smul.f32 %s111, %s112
    %s114 = smul.f32 %s113, %s110
    %s115 = sld [smem:[#allocation9]]
    %s116 = smul.f32 %s112, %s110
    %s117 = smul.f32 %s116, %s88
    %s118 = ssub.f32 %s115, %s117
    %s119 = smul.f32 %s111, %s118
    %s120 = sadd.f32 %s72, %s119
    %v121 = vstv %s114
    %v122 = vmul.f32 %v121, %v73
    %v123 = vmul.f32 %v121, %v74
    %v124 = vadd.f32 %v122, 0.0
    %v125 = vadd.f32 %v123, 0.0
    %s126 = scalar_lea.vmem [#allocation10], 2
    %v127 = vld [vmem:[%s126] sm:$0x3]
    %v128 = vld [vmem:[%s126 + $0x8] sm:$0x3]
    %v129 = vsel %vm75, %v127, 0.0
    %v130 = vsel %vm75, %v128, 0.0
    %v131 = vadd.f32 %v129, %v130
    %132 = vadd.xlane.f32.xlu0 %v131
    %v133 = vpop.xlane.xlu0 %132
    %v134 = vrot.slane %v133, 4
    %v135 = vadd.f32 %v133, %v134
    %v136 = vrot.slane %v135, 2
    %v137 = vadd.f32 %v135, %v136
    %v138 = vrot.slane %v137, 1
    %v139 = vadd.f32 %v137, %v138
    %s140 = vtos %v139
    %s141 = smul.f32 %s140, 0.001953125
    %v142 = vmul.f32 %v127, %v127
    %v143 = vmul.f32 %v128, %v128
    %v144 = vsel %vm75, %v142, 0.0
    %v145 = vsel %vm75, %v143, 0.0
    %v146 = vadd.f32 %v144, %v145
    %147 = vadd.xlane.f32.xlu0 %v146
    %v148 = vpop.xlane.xlu0 %147
    %v149 = vrot.slane %v148, 4
    %v150 = vadd.f32 %v148, %v149
    %v151 = vrot.slane %v150, 2
    %v152 = vadd.f32 %v150, %v151
    %v153 = vrot.slane %v152, 1
    %v154 = vadd.f32 %v152, %v153
    %s155 = vtos %v154
    %s156 = smul.f32 %s155, 0.001953125
    %s157 = smul.f32 %s141, %s141
    %s158 = ssub.f32 %s156, %s157
    %s159 = smax.f32 %s158, 0.0
    %s160 = sadd.f32 %s159, 1e-05
    %v161 = vstv %s160
    %v162 = vrsqrt.pop %v161
    %s163 = vtos %v162
    %s164 = sld [smem:[#allocation3 + $0x1]]
    %s165 = sld [smem:[#allocation7 + $0x1]]
    %s166 = smul.f32 %s164, %s165
    %s167 = smul.f32 %s166, %s163
    %s168 = sld [smem:[#allocation9 + $0x1]]
    %s169 = smul.f32 %s165, %s163
    %s170 = smul.f32 %s169, %s141
    %s171 = ssub.f32 %s168, %s170
    %s172 = smul.f32 %s164, %s171
    %s173 = sadd.f32 %s120, %s172
    %v174 = vstv %s167
    %v175 = vmul.f32 %v174, %v127
    %v176 = vmul.f32 %v174, %v128
    %v177 = vadd.f32 %v124, %v175
    %v178 = vadd.f32 %v125, %v176
    %s179 = scalar_lea.vmem [#allocation10], 4
    %v180 = vld [vmem:[%s179] sm:$0x3]
    %v181 = vld [vmem:[%s179 + $0x8] sm:$0x3]
    %v182 = vsel %vm75, %v180, 0.0
    %v183 = vsel %vm75, %v181, 0.0
    %v184 = vadd.f32 %v182, %v183
    %185 = vadd.xlane.f32.xlu0 %v184
    %v186 = vpop.xlane.xlu0 %185
    %v187 = vrot.slane %v186, 4
    %v188 = vadd.f32 %v186, %v187
    %v189 = vrot.slane %v188, 2
    %v190 = vadd.f32 %v188, %v189
    %v191 = vrot.slane %v190, 1
    %v192 = vadd.f32 %v190, %v191
    %s193 = vtos %v192
    %s194 = smul.f32 %s193, 0.001953125
    %v195 = vmul.f32 %v180, %v180
    %v196 = vmul.f32 %v181, %v181
    %v197 = vsel %vm75, %v195, 0.0
    %v198 = vsel %vm75, %v196, 0.0
    %v199 = vadd.f32 %v197, %v198
    %200 = vadd.xlane.f32.xlu0 %v199
    %v201 = vpop.xlane.xlu0 %200
    %v202 = vrot.slane %v201, 4
    %v203 = vadd.f32 %v201, %v202
    %v204 = vrot.slane %v203, 2
    %v205 = vadd.f32 %v203, %v204
    %v206 = vrot.slane %v205, 1
    %v207 = vadd.f32 %v205, %v206
    %s208 = vtos %v207
    %s209 = smul.f32 %s208, 0.001953125
    %s210 = smul.f32 %s194, %s194
    %s211 = ssub.f32 %s209, %s210
    %s212 = smax.f32 %s211, 0.0
    %s213 = sadd.f32 %s212, 1e-05
    %v214 = vstv %s213
    %v215 = vrsqrt.pop %v214
    %s216 = vtos %v215
    %s217 = sld [smem:[#allocation3 + $0x2]]
    %s218 = sld [smem:[#allocation7 + $0x2]]
    %s219 = smul.f32 %s217, %s218
    %s220 = smul.f32 %s219, %s216
    %s221 = sld [smem:[#allocation9 + $0x2]]
    %s222 = smul.f32 %s218, %s216
    %s223 = smul.f32 %s222, %s194
    %s224 = ssub.f32 %s221, %s223
    %s225 = smul.f32 %s217, %s224
    %s226 = sadd.f32 %s173, %s225
    %v227 = vstv %s220
    %v228 = vmul.f32 %v227, %v180
    %v229 = vmul.f32 %v227, %v181
    %v230 = vadd.f32 %v177, %v228
    %v231 = vadd.f32 %v178, %v229
    %s232 = scalar_lea.vmem [#allocation10], 6
    %v233 = vld [vmem:[%s232] sm:$0x3]
    %v234 = vld [vmem:[%s232 + $0x8] sm:$0x3]
    %v235 = vsel %vm75, %v233, 0.0
    %v236 = vsel %vm75, %v234, 0.0
    %v237 = vadd.f32 %v235, %v236
    %238 = vadd.xlane.f32.xlu0 %v237
    %v239 = vpop.xlane.xlu0 %238
    %v240 = vrot.slane %v239, 4
    %v241 = vadd.f32 %v239, %v240
    %v242 = vrot.slane %v241, 2
    %v243 = vadd.f32 %v241, %v242
    %v244 = vrot.slane %v243, 1
    %v245 = vadd.f32 %v243, %v244
    %s246 = vtos %v245
    %s247 = smul.f32 %s246, 0.001953125
    %v248 = vmul.f32 %v233, %v233
    %v249 = vmul.f32 %v234, %v234
    %v250 = vsel %vm75, %v248, 0.0
    %v251 = vsel %vm75, %v249, 0.0
    %v252 = vadd.f32 %v250, %v251
    %253 = vadd.xlane.f32.xlu0 %v252
    %v254 = vpop.xlane.xlu0 %253
    %v255 = vrot.slane %v254, 4
    %v256 = vadd.f32 %v254, %v255
    %v257 = vrot.slane %v256, 2
    %v258 = vadd.f32 %v256, %v257
    %v259 = vrot.slane %v258, 1
    %v260 = vadd.f32 %v258, %v259
    %s261 = vtos %v260
    %s262 = smul.f32 %s261, 0.001953125
    %s263 = smul.f32 %s247, %s247
    %s264 = ssub.f32 %s262, %s263
    %s265 = smax.f32 %s264, 0.0
    %s266 = sadd.f32 %s265, 1e-05
    %v267 = vstv %s266
    %v268 = vrsqrt.pop %v267
    %s269 = vtos %v268
    %s270 = sld [smem:[#allocation3 + $0x3]]
    %s271 = sld [smem:[#allocation7 + $0x3]]
    %s272 = smul.f32 %s270, %s271
    %s273 = smul.f32 %s272, %s269
    %s274 = sld [smem:[#allocation9 + $0x3]]
    %s275 = smul.f32 %s271, %s269
    %s276 = smul.f32 %s275, %s247
    %s277 = ssub.f32 %s274, %s276
    %s278 = smul.f32 %s270, %s277
    %s279 = sadd.f32 %s226, %s278
    %v280 = vstv %s273
    %v281 = vmul.f32 %v280, %v233
    %v282 = vmul.f32 %v280, %v234
    %v283 = vadd.f32 %v230, %v281
    %v284 = vadd.f32 %v231, %v282
    %v285 = vstv %s279
    %v286 = vadd.f32 %v283, %v285
    %v287 = vadd.f32 %v284, %v285
    %288 = vst [vmem:[#allocation11] sm:$0x3] %v286
    %289 = vst [vmem:[#allocation11 + $0x2] sm:$0x3] %v287
    // Predicated region
    $region38: #{tpu_custom_call.1} parent=1 // pred_check
      _
    $region39: #{tpu_custom_call.1} parent=1 // pred_check_branch
      %291 = sbr.rel (0) target = $region41
    $region40: #{tpu_custom_call.1} parent=1 // pred_region
      %s293 = ssub.s32 64, 64
      %294 = vsyncadd [#allocation5], %s293
      %s295 = sshll.u32 [#allocation11], 4
      %s296 = int_to_ptr.vmem [resolvable:$true] %s295
      %301 = dma.vmem_to_hbm [thread:$0]  %s296, 64, %s5, [#allocation5], 32, 32, 2
    $region41: #{tpu_custom_call.1} parent=1 // pred_fallthru
      _
    // Predicated region
    $region42: #{tpu_custom_call.1} parent=1 // pred_check
      _
    $region43: #{tpu_custom_call.1} parent=1 // pred_check_branch
      %303 = sbr.rel (0) target = $region45
    $region44: #{tpu_custom_call.1} parent=1 // pred_region
      %304 = dma.done [#allocation5], 64
    $region45: #{tpu_custom_call.1} parent=1 // pred_fallthru
      _
    %305 = vsyncpa [#allocation4], 1
    %306 = vsyncpa [#allocation5], 1
    %307 = vsyncpa [#allocation6], 1
    %308 = vsyncpa [#allocation8], 1

</llo_original>
